<compile_context>
chip_gen: v7x
topology: tpu7x:2x2x1
jax: 0.10.0
libtpu: 0.0.40
codegen_flags: <defaults>
</compile_context>

<pallas_src>
import functools
import math

import jax
import jax.numpy as jnp
import numpy as np
from jax import lax
from jax.experimental import pallas as pl
from jax.experimental.pallas import tpu as pltpu


# ----------------------------------------------------------------------------
# Pallas kernel: fused hinge penalty, per-row-block accumulation into an
# (8, L) f32 VMEM scratch, tail masking in the last block, per-partition
# partial sum written at the last inner step.
# ----------------------------------------------------------------------------
def _safety_kernel(x_ref, mins_ref, maxs_ref, w_ref, out_ref, acc_ref, *,
                   n_blk, inner_steps, n_valid, needs_weight, needs_lane_mask):
    p = pl.program_id(0)            # "parallel" partition
    g = pl.program_id(1)            # "arbitrary" accumulation step
    r = p * inner_steps + g         # row-block this step is responsible for

    @pl.when(g == 0)
    def _init():
        acc_ref[...] = jnp.zeros_like(acc_ref)

    x = x_ref[...]
    mins = mins_ref[...]
    if x.dtype != mins.dtype:       # bf16 stays bf16; f16/int -> f32 on VPU
        x = x.astype(mins.dtype)

    # min < max  =>  relu(min-x) + relu(x-max) == max(min-x, x-max, 0)
    hinge = jnp.maximum(jnp.maximum(mins - x, x - maxs_ref[...]), 0.0)
    if needs_weight:                # a lane matched multiple keys (rare)
        hinge = hinge * w_ref[...]
    if needs_lane_mask:             # some lanes unmatched: zero them (NaN-safe)
        hinge = jnp.where(w_ref[...] > 0, hinge, 0.0)
    contrib = hinge.astype(jnp.float32)
    tb, L = contrib.shape

    def _accum(c):
        # (tb, L) -> (tb//8, 8, L) is a free sublane regrouping; axis-0 sum is
        # pure VPU adds.  Cross-lane reduce happens only at finalize.
        acc_ref[...] += c.reshape(-1, 8, L).sum(axis=0)

    @pl.when(r < n_blk - 1)
    def _steady():
        _accum(contrib)

    @pl.when(r == n_blk - 1)
    def _tail():
        # Mask pad rows / ragged-block garbage: element (row, lane) is valid
        # iff its flat index row*L + lane < n_valid (= B*F).  Decomposed into
        # a (tb,1) row mask and a (1,L) lane mask to avoid a full i32 temp.
        rv_full = n_valid // L
        rem = n_valid % L
        row_id = r * tb + lax.broadcasted_iota(jnp.int32, (tb, 1), 0)
        lane_id = lax.broadcasted_iota(jnp.int32, (1, L), 1)
        valid = (row_id < rv_full) | ((row_id == rv_full) & (lane_id < rem))
        _accum(jnp.where(valid, contrib, 0.0))

    @pl.when(g == inner_steps - 1)
    def _finalize():
        total = jnp.sum(acc_ref[...])
        out_ref[...] = jnp.full((1, 128), total, dtype=jnp.float32)


@functools.lru_cache(maxsize=1)
def _vmem_plan():
    """(x-tile budget in f32-equivalent bytes, vmem_limit_bytes) per chip."""
    try:
        kind = jax.devices()[0].device_kind.lower()
    except Exception:       # pragma: no cover
        kind = ""
    if "v7" in kind:                       # 64 MiB physical VMEM per TC
        return 7 * 1024 * 1024, 48 * 1024 * 1024
    if any(t in kind for t in ("v6", "v5", "v4")):   # 128 MiB physical VMEM
        return 10 * 1024 * 1024, 64 * 1024 * 1024
    return 6 * 1024 * 1024, 32 * 1024 * 1024          # unknown: known-good


@functools.partial(jax.jit,
                   static_argnames=("needs_weight", "needs_lane_mask",
                                    "tile_rows"))
def _safety_loss(x, mins_row, maxs_row, w_row, *, needs_weight,
                 needs_lane_mask, tile_rows=None):
    """x: (B, F) in its native dtype.  mins/maxs/w rows: (1, L) f32 where
    L = k*F is a multiple of 128 (lane-dense fold of k batch rows)."""
    B, F = x.shape
    L = mins_row.shape[1]
    k = L // F

    itemsize = np.dtype(x.dtype).itemsize
    sub = {4: 8, 2: 16, 1: 32}.get(itemsize, 8)       # sublane packing
    compute_dtype = jnp.bfloat16 if x.dtype == jnp.bfloat16 else jnp.float32

    budget, vmem_limit = _vmem_plan()
    if tile_rows is None:
        # Budget expressed in f32 bytes so bf16 tiles leave extra headroom for
        # the f32 temporaries created inside the kernel.
        tb_max = max(sub, (budget // (L * 4)) // sub * sub)
    else:
        tb_max = max(sub, -(-int(tile_rows) // sub) * sub)

    # Pad only to the next multiple of k*sub (tiny); pad VALUE is irrelevant
    # because the in-kernel tail mask excludes every element with flat index
    # >= B*F.  When B is already aligned the reshape below is a pure bitcast.
    align = k * sub
    b_pad = -(-B // align) * align
    if b_pad != B:
        x = jnp.concatenate(
            [x, jnp.zeros((b_pad - B, F), dtype=x.dtype)], axis=0)
    rows = b_pad // k
    xr = x.reshape(rows, L)                            # lane-dense layout

    tb = min(tb_max, rows)                             # multiple of sub
    n_blk = -(-rows // tb)
    P = 2 if n_blk >= 2 else 1                         # "parallel" partitions
    G = -(-n_blk // P)                                 # inner steps / partition

    mins_c = mins_row.astype(compute_dtype)
    maxs_c = maxs_row.astype(compute_dtype)
    w_c = w_row.astype(compute_dtype)

    kernel = functools.partial(
        _safety_kernel, n_blk=n_blk, inner_steps=G, n_valid=B * F,
        needs_weight=needs_weight, needs_lane_mask=needs_lane_mask)

    out = pl.pallas_call(
        kernel,
        out_shape=jax.ShapeDtypeStruct((P, 128), jnp.float32),
        grid_spec=pltpu.PrefetchScalarGridSpec(
            num_scalar_prefetch=0,
            grid=(P, G),
            in_specs=[
                # Clamp keeps the DMA in bounds for over-provisioned steps
                # (their contribution is skipped in-kernel).
                pl.BlockSpec((tb, L),
                             lambda p, g: (jnp.minimum(p * G + g, n_blk - 1),
                                           0)),
                pl.BlockSpec((1, L), lambda p, g: (0, 0)),
                pl.BlockSpec((1, L), lambda p, g: (0, 0)),
                pl.BlockSpec((1, L), lambda p, g: (0, 0)),
            ],
            out_specs=pl.BlockSpec((1, 128), lambda p, g: (p, 0)),
            scratch_shapes=[pltpu.VMEM((8, L), jnp.float32)],
        ),
        compiler_params=pltpu.CompilerParams(
            dimension_semantics=("parallel", "arbitrary"),
            vmem_limit_bytes=vmem_limit,
        ),
    )(xr, mins_c, maxs_c, w_c)

    return jnp.sum(out[:, 0]) / B                      # mean over FULL batch


# ----------------------------------------------------------------------------
# Python wrapper mirroring MedicalSafetyLayer.
# ----------------------------------------------------------------------------
DEFAULT_FEATURE_RANGES = {
    'S_AD': (80.0, 180.0),
    'D_AD': (40.0, 120.0),
    'RATE_AD': (40.0, 180.0),
    'TEMP_AD': (35.0, 41.0),
    'K_BLOOD': (3.0, 6.0),
    'Na_BLOOD': (130.0, 150.0),
    'L_BLOOD': (4.0, 25.0),
}


class MedicalSafetyLayerPallas:
    def __init__(self, feature_ranges=None):
        self.feature_ranges = dict(feature_ranges or DEFAULT_FEATURE_RANGES)
        self._cache = {}  # tuple(feature_names) -> prepared device arrays

    def _build_params(self, feature_names):
        F = len(feature_names)
        per_col = [[] for _ in range(F)]
        for i, name in enumerate(feature_names):
            for key, (mn, mx) in self.feature_ranges.items():
                if key in name:
                    per_col[i].append((float(mn), float(mx)))
        if sum(len(m) for m in per_col) == 0:
            return None  # no matches -> loss stays 0.0

        simple = all(len(set(m)) <= 1 for m in per_col)
        if simple:
            # One (possibly repeated) range per matched column; multiplicity
            # handled via the weight row.
            cols = None
            nf = F
            mins = np.zeros(nf, np.float32)
            maxs = np.zeros(nf, np.float32)
            cnt = np.zeros(nf, np.float32)
            for i, m in enumerate(per_col):
                if m:
                    mn, mx = m[0]
                    mins[i], maxs[i] = mn, mx
                    cnt[i] = float(len(m))
        else:
            # A column matches keys with different ranges: expand to one
            # column per (feature, key) match -> exact nested-loop semantics.
            cols_l, mins_l, maxs_l = [], [], []
            for i, m in enumerate(per_col):
                for mn, mx in m:
                    cols_l.append(i)
                    mins_l.append(mn)
                    maxs_l.append(mx)
            cols = jnp.asarray(cols_l, dtype=jnp.int32)
            nf = len(cols_l)
            mins = np.asarray(mins_l, np.float32)
            maxs = np.asarray(maxs_l, np.float32)
            cnt = np.ones(nf, np.float32)

        k = 128 // math.gcd(nf, 128)             # fold k rows -> lane-dense
        L = k * nf
        mins_row = jnp.asarray(np.tile(mins, k).reshape(1, L))
        maxs_row = jnp.asarray(np.tile(maxs, k).reshape(1, L))
        w_row = jnp.asarray(np.tile(cnt, k).reshape(1, L))
        needs_weight = bool(np.any(cnt > 1.0))
        needs_lane_mask = bool(np.any(cnt == 0.0))
        return cols, mins_row, maxs_row, w_row, needs_weight, needs_lane_mask

    def __call__(self, x, feature_names=None, *, tile_rows=None):
        if feature_names is None:
            return (x, None)
        key = tuple(feature_names)
        if key not in self._cache:
            self._cache[key] = self._build_params(feature_names)
        params = self._cache[key]
        if params is None:
            return (x, jnp.float32(0.0))
        cols, mins_row, maxs_row, w_row, needs_weight, needs_lane_mask = params
        xin = x if cols is None else jnp.take(x, cols, axis=1)
        loss = _safety_loss(xin, mins_row, maxs_row, w_row,
                            needs_weight=needs_weight,
                            needs_lane_mask=needs_lane_mask,
                            tile_rows=tile_rows)
        return (x, loss)


# ----------------------------------------------------------------------------
# Pure-JAX reference mirroring the PyTorch nested loops (f32 math).
# ----------------------------------------------------------------------------
def _reference_loss(x, feature_names, feature_ranges):
    xf = jnp.asarray(x, dtype=jnp.float32)
    loss = jnp.float32(0.0)
    for i, name in enumerate(feature_names):
        for key, (mn, mx) in feature_ranges.items():
            if key in name:
                col = xf[:, i]
                loss = loss + jnp.mean(jnp.maximum(mn - col, 0.0) +
                                       jnp.maximum(col - mx, 0.0))
    return loss


if __name__ == "__main__":
    key = jax.random.PRNGKey(0)
    layer = MedicalSafetyLayerPallas()
    feature_names = ['S_AD_ORIT', 'D_AD_ORIT', 'RATE_AD', 'TEMP_AD',
                     'K_BLOOD', 'Na_BLOOD', 'L_BLOOD', 'AGE']

    # 1) Small f32 batch: pad-to-alignment + in-kernel tail masking, grid=(1,1).
    x = jax.random.uniform(key, (8, 8), jnp.float32, minval=0.0, maxval=250.0)
    x_out, loss = layer(x, feature_names)
    loss = jax.block_until_ready(loss)
    ref = _reference_loss(x, feature_names, layer.feature_ranges)
    assert jnp.allclose(x_out, x), "passthrough x changed"
    assert jnp.allclose(loss, ref, rtol=1e-5, atol=1e-3), (loss, ref)

    # 2) bf16 input: native bf16 hinge math in-kernel (f32 accumulation).
    xb = x.astype(jnp.bfloat16)
    _, loss_b = layer(xb, feature_names)
    ref_b = _reference_loss(xb, feature_names, layer.feature_ranges)
    assert jnp.allclose(loss_b, ref_b, rtol=5e-2, atol=5e-1), (loss_b, ref_b)

    # 3) Multi-block + 2-way "parallel" partial sums (tiny tile override).
    x_big = jax.random.uniform(jax.random.PRNGKey(1), (400, 8), jnp.float32,
                               minval=0.0, maxval=250.0)
    _, loss_big = layer(x_big, feature_names, tile_rows=8)
    ref_big = _reference_loss(x_big, feature_names, layer.feature_ranges)
    assert jnp.allclose(loss_big, ref_big, rtol=1e-4, atol=1e-2), (loss_big,
                                                                   ref_big)

    # 3b) Alignment-friendly batch (zero-copy reshape path), default tiling.
    x_al = jax.random.uniform(jax.random.PRNGKey(2), (256, 8), jnp.float32,
                              minval=0.0, maxval=250.0)
    _, loss_al = layer(x_al, feature_names)
    ref_al = _reference_loss(x_al, feature_names, layer.feature_ranges)
    assert jnp.allclose(loss_al, ref_al, rtol=1e-4, atol=1e-2), (loss_al,
                                                                 ref_al)

    # 4) NaN in an unmatched column ('AGE') must be ignored, like the reference.
    x_nan = x.at[:, 7].set(jnp.nan)
    _, loss_nan = layer(x_nan, feature_names)
    ref_nan = _reference_loss(x_nan, feature_names, layer.feature_ranges)
    assert jnp.isfinite(loss_nan)
    assert jnp.allclose(loss_nan, ref_nan, rtol=1e-5, atol=1e-3)

    # 5) A name matching multiple keys with DIFFERENT ranges (expansion path).
    custom = MedicalSafetyLayerPallas({'AD': (0.0, 10.0),
                                       'S_AD': (80.0, 180.0)})
    _, loss_c = custom(x, feature_names)
    ref_c = _reference_loss(x, feature_names, custom.feature_ranges)
    assert jnp.allclose(loss_c, ref_c, rtol=1e-5, atol=1e-3), (loss_c, ref_c)

    # 6) feature_names=None and no-match paths.
    _, none_loss = layer(x, None)
    assert none_loss is None
    _, zero_loss = layer(x, ['A', 'B', 'C', 'D', 'E', 'F', 'G', 'H'])
    assert float(zero_loss) == 0.0

    jax.block_until_ready(loss_big)
    print("KERNEL_OK")
</pallas_src>

<mosaic_0001>
module attributes {stable_mosaic.version = 11 : i64} {
  func.func @_safety_kernel(%arg0: i32, %arg1: i32, %arg2: memref<8x128xf32, #tpu.memory_space<vmem>>, %arg3: memref<1x128xf32, #tpu.memory_space<vmem>>, %arg4: memref<1x128xf32, #tpu.memory_space<vmem>>, %arg5: memref<1x128xf32, #tpu.memory_space<vmem>>, %arg6: memref<1x128xf32, #tpu.memory_space<vmem>>, %arg7: memref<8x128xf32, #tpu.memory_space<vmem>>) attributes {dimension_semantics = [#tpu.dimension_semantics<parallel>, #tpu.dimension_semantics<arbitrary>], iteration_bounds = array<i64: 1, 1>, scalar_prefetch = 0 : i64, scratch_operands = 1 : i64, tpu.core_type = #tpu.core_type<tc>, window_params = [{transform_indices = @transform_0, window_bounds = array<i64: 8, 128>}, {pipeline_mode = #tpu.pipeline_mode<synchronous>, transform_indices = @transform_1, window_bounds = array<i64: 1, 128>}, {pipeline_mode = #tpu.pipeline_mode<synchronous>, transform_indices = @transform_2, window_bounds = array<i64: 1, 128>}, {pipeline_mode = #tpu.pipeline_mode<synchronous>, transform_indices = @transform_3, window_bounds = array<i64: 1, 128>}, {transform_indices = @transform_4, window_bounds = array<i64: 1, 128>}]} {
    %c1_i32 = arith.constant 1 : i32
    %0 = arith.muli %arg0, %c1_i32 : i32
    %1 = arith.addi %0, %arg1 : i32
    %c0_i32 = arith.constant 0 : i32
    %2 = arith.cmpi eq, %arg1, %c0_i32 : i32
    %3 = arith.extui %2 : i1 to i32
    %c0_i32_0 = arith.constant 0 : i32
    %4 = arith.cmpi ne, %3, %c0_i32_0 : i32
    scf.if %4 {
      %cst_16 = arith.constant 0.000000e+00 : f32
      %31 = vector.broadcast %cst_16 : f32 to vector<8x128xf32>
      %c0_17 = arith.constant 0 : index
      %c0_18 = arith.constant 0 : index
      %32 = vector.load %arg7[%c0_17, %c0_18] : memref<8x128xf32, #tpu.memory_space<vmem>>, vector<8x128xf32>
      tpu.vector_store %arg7[%c0_17, %c0_18], %31 {strides = array<i32>} : memref<8x128xf32, #tpu.memory_space<vmem>>, vector<8x128xf32>,
    } else {
    }
    %c0 = arith.constant 0 : index
    %c0_1 = arith.constant 0 : index
    %5 = vector.load %arg2[%c0, %c0_1] : memref<8x128xf32, #tpu.memory_space<vmem>>, vector<8x128xf32>
    %c0_2 = arith.constant 0 : index
    %c0_3 = arith.constant 0 : index
    %6 = vector.load %arg3[%c0_2, %c0_3] : memref<1x128xf32, #tpu.memory_space<vmem>>, vector<1x128xf32>
    %7 = vector.broadcast %6 : vector<1x128xf32> to vector<8x128xf32>
    %8 = arith.subf %7, %5 : vector<8x128xf32>
    %c0_4 = arith.constant 0 : index
    %c0_5 = arith.constant 0 : index
    %9 = vector.load %arg4[%c0_4, %c0_5] : memref<1x128xf32, #tpu.memory_space<vmem>>, vector<1x128xf32>
    %10 = vector.broadcast %9 : vector<1x128xf32> to vector<8x128xf32>
    %11 = arith.subf %5, %10 : vector<8x128xf32>
    %12 = arith.maximumf %8, %11 : vector<8x128xf32>
    %cst = arith.constant 0.000000e+00 : f32
    %13 = vector.broadcast %cst : f32 to vector<8x128xf32>
    %14 = arith.maximumf %12, %13 : vector<8x128xf32>
    %c0_6 = arith.constant 0 : index
    %c0_7 = arith.constant 0 : index
    %15 = vector.load %arg5[%c0_6, %c0_7] : memref<1x128xf32, #tpu.memory_space<vmem>>, vector<1x128xf32>
    %cst_8 = arith.constant 0.000000e+00 : f32
    %16 = vector.broadcast %cst_8 : f32 to vector<1x128xf32>
    %17 = arith.cmpf ogt, %15, %16 : vector<1x128xf32>
    %cst_9 = arith.constant 0.000000e+00 : f32
    %18 = vector.shape_cast %17 : vector<1x128xi1> to vector<1x128xi1>
    %19 = vector.broadcast %18 : vector<1x128xi1> to vector<8x128xi1>
    %20 = vector.broadcast %cst_9 : f32 to vector<8x128xf32>
    %21 = arith.select %19, %14, %20 : vector<8x128xi1>, vector<8x128xf32>
    %c0_i32_10 = arith.constant 0 : i32
    %22 = arith.cmpi slt, %1, %c0_i32_10 : i32
    %23 = arith.extui %22 : i1 to i32
    %c0_i32_11 = arith.constant 0 : i32
    %24 = arith.cmpi ne, %23, %c0_i32_11 : i32
    scf.if %24 {
      %c0_16 = arith.constant 0 : index
      %c0_17 = arith.constant 0 : index
      %31 = vector.load %arg7[%c0_16, %c0_17] : memref<8x128xf32, #tpu.memory_space<vmem>>, vector<8x128xf32>
      %32 = vector.shape_cast %21 : vector<8x128xf32> to vector<1x8x128xf32>
      %cst_18 = arith.constant dense<0.000000e+00> : vector<8x128xf32>
      %33 = vector.multi_reduction <add>, %32, %cst_18 [0] : vector<1x8x128xf32> to vector<8x128xf32>
      %34 = arith.addf %31, %33 : vector<8x128xf32>
      %c0_19 = arith.constant 0 : index
      %c0_20 = arith.constant 0 : index
      %35 = vector.load %arg7[%c0_19, %c0_20] : memref<8x128xf32, #tpu.memory_space<vmem>>, vector<8x128xf32>
      tpu.vector_store %arg7[%c0_19, %c0_20], %34 {strides = array<i32>} : memref<8x128xf32, #tpu.memory_space<vmem>>, vector<8x128xf32>,
    } else {
    }
    %c0_i32_12 = arith.constant 0 : i32
    %25 = arith.cmpi eq, %1, %c0_i32_12 : i32
    %26 = arith.extui %25 : i1 to i32
    %c0_i32_13 = arith.constant 0 : i32
    %27 = arith.cmpi ne, %26, %c0_i32_13 : i32
    scf.if %27 {
      %c8_i32 = arith.constant 8 : i32
      %31 = arith.muli %1, %c8_i32 : i32
      %32 = tpu.iota {dimensions = array<i32: 0>} : vector<8x1xi32>
      %33 = vector.broadcast %31 : i32 to vector<8x1xi32>
      %34 = arith.addi %33, %32 : vector<8x1xi32>
      %35 = tpu.iota {dimensions = array<i32: 1>} : vector<1x128xi32>
      %c0_i32_16 = arith.constant 0 : i32
      %36 = vector.broadcast %c0_i32_16 : i32 to vector<8x1xi32>
      %37 = arith.cmpi slt, %34, %36 : vector<8x1xi32>
      %c0_i32_17 = arith.constant 0 : i32
      %38 = vector.broadcast %c0_i32_17 : i32 to vector<8x1xi32>
      %39 = arith.cmpi eq, %34, %38 : vector<8x1xi32>
      %c64_i32 = arith.constant 64 : i32
      %40 = vector.broadcast %c64_i32 : i32 to vector<1x128xi32>
      %41 = arith.cmpi slt, %35, %40 : vector<1x128xi32>
      %42 = vector.broadcast %39 : vector<8x1xi1> to vector<8x128xi1>
      %43 = vector.broadcast %41 : vector<1x128xi1> to vector<8x128xi1>
      %44 = arith.andi %42, %43 : vector<8x128xi1>
      %45 = vector.broadcast %37 : vector<8x1xi1> to vector<8x128xi1>
      %46 = arith.ori %45, %44 : vector<8x128xi1>
      %cst_18 = arith.constant 0.000000e+00 : f32
      %47 = vector.broadcast %cst_18 : f32 to vector<8x128xf32>
      %48 = arith.select %46, %21, %47 : vector<8x128xi1>, vector<8x128xf32>
      %c0_19 = arith.constant 0 : index
      %c0_20 = arith.constant 0 : index
      %49 = vector.load %arg7[%c0_19, %c0_20] : memref<8x128xf32, #tpu.memory_space<vmem>>, vector<8x128xf32>
      %50 = vector.shape_cast %48 : vector<8x128xf32> to vector<1x8x128xf32>
      %cst_21 = arith.constant dense<0.000000e+00> : vector<8x128xf32>
      %51 = vector.multi_reduction <add>, %50, %cst_21 [0] : vector<1x8x128xf32> to vector<8x128xf32>
      %52 = arith.addf %49, %51 : vector<8x128xf32>
      %c0_22 = arith.constant 0 : index
      %c0_23 = arith.constant 0 : index
      %53 = vector.load %arg7[%c0_22, %c0_23] : memref<8x128xf32, #tpu.memory_space<vmem>>, vector<8x128xf32>
      tpu.vector_store %arg7[%c0_22, %c0_23], %52 {strides = array<i32>} : memref<8x128xf32, #tpu.memory_space<vmem>>, vector<8x128xf32>,
    } else {
    }
    %c0_i32_14 = arith.constant 0 : i32
    %28 = arith.cmpi eq, %arg1, %c0_i32_14 : i32
    %29 = arith.extui %28 : i1 to i32
    %c0_i32_15 = arith.constant 0 : i32
    %30 = arith.cmpi ne, %29, %c0_i32_15 : i32
    scf.if %30 {
      %c0_16 = arith.constant 0 : index
      %c0_17 = arith.constant 0 : index
      %31 = vector.load %arg7[%c0_16, %c0_17] : memref<8x128xf32, #tpu.memory_space<vmem>>, vector<8x128xf32>
      %32 = vector.shape_cast %31 : vector<8x128xf32> to vector<1x8x128xf32>
      %cst_18 = arith.constant dense<0.000000e+00> : vector<1xf32>
      %33 = vector.multi_reduction <add>, %32, %cst_18 [1, 2] : vector<1x8x128xf32> to vector<1xf32>
      %34 = vector.shape_cast %33 : vector<1xf32> to vector<1x1x1xf32>
      %35 = vector.extract %34[0, 0, 0] : f32 from vector<1x1x1xf32>
      %36 = vector.broadcast %35 : f32 to vector<1x128xf32>
      %c0_19 = arith.constant 0 : index
      %c0_20 = arith.constant 0 : index
      %37 = vector.load %arg6[%c0_19, %c0_20] : memref<1x128xf32, #tpu.memory_space<vmem>>, vector<1x128xf32>
      tpu.vector_store %arg6[%c0_19, %c0_20], %36 {strides = array<i32>} : memref<1x128xf32, #tpu.memory_space<vmem>>, vector<1x128xf32>,
    } else {
    }
    return
  }
  func.func @transform_0(%arg0: i32, %arg1: i32) -> (i32, i32) {
    %c1_i32 = arith.constant 1 : i32
    %0 = arith.muli %arg0, %c1_i32 : i32
    %1 = arith.addi %0, %arg1 : i32
    %c0_i32 = arith.constant 0 : i32
    %2 = arith.minsi %1, %c0_i32 : i32
    %c0_i32_0 = arith.constant 0 : i32
    %c0_i32_1 = arith.constant 0 : i32
    return %2, %c0_i32_0 : i32, i32
  }
  func.func @transform_1(%arg0: i32, %arg1: i32) -> (i32, i32) {
    %c0_i32 = arith.constant 0 : i32
    %c0_i32_0 = arith.constant 0 : i32
    %c0_i32_1 = arith.constant 0 : i32
    return %c0_i32, %c0_i32_0 : i32, i32
  }
  func.func @transform_2(%arg0: i32, %arg1: i32) -> (i32, i32) {
    %c0_i32 = arith.constant 0 : i32
    %c0_i32_0 = arith.constant 0 : i32
    %c0_i32_1 = arith.constant 0 : i32
    return %c0_i32, %c0_i32_0 : i32, i32
  }
  func.func @transform_3(%arg0: i32, %arg1: i32) -> (i32, i32) {
    %c0_i32 = arith.constant 0 : i32
    %c0_i32_0 = arith.constant 0 : i32
    %c0_i32_1 = arith.constant 0 : i32
    return %c0_i32, %c0_i32_0 : i32, i32
  }
  func.func @transform_4(%arg0: i32, %arg1: i32) -> (i32, i32) {
    %c0_i32 = arith.constant 0 : i32
    %c0_i32_0 = arith.constant 0 : i32
    return %arg0, %c0_i32 : i32, i32
  }
}

</mosaic_0001>

<llo_original>
// kernel: _safety_loss.1
$region0: #{_safety_loss.1}
  #allocation0 [shape = 'u32[]', space=smem, size = 0x4, offset = 0x4, fixed_abs, tag = 'smem constant byte address 0x4 - core index']
  #allocation1 [shape = 'u32[144,128]{1,0:T(1,128)}', space=vmem, size = 0x12000, scoped, tag = 'internal scratch']
  #allocation2 [shape = 'f32[8,128]{1,0:T(8,128)}', space=vmem, size = 0x1000, scoped, tag = 'scratch operand']
  %s0 = inlined_call_operand.vmem [shape: f32[8,128], index: 0, kind: input, shape index: {}]
  %s1 = inlined_call_operand.vmem [shape: f32[1,128], index: 1, kind: input, shape index: {}]
  %s2 = inlined_call_operand.vmem [shape: f32[1,128], index: 2, kind: input, shape index: {}]
  %s3 = inlined_call_operand.vmem [shape: f32[1,128], index: 3, kind: input, shape index: {}]
  %s4 = inlined_call_operand.vmem [shape: f32[1,128], index: 4, kind: output, shape index: {}]
  %s5 = sld [smem:[#allocation0]]
  $region42: #{_safety_loss.1} parent=0
    _
  %s7 = ssub.s32 1, %s5
  %s8 = scalar_select 0, %s7, %s5
  // Predicated region
  $region2: #{_safety_loss.1} parent=0 // pred_check
    _
  $region3: #{_safety_loss.1} parent=0 // pred_check_branch
    %10 = sbr.rel (0) target = $region5
  $region4: #{_safety_loss.1} parent=0 // pred_region
    %s11 = sadd.s32 0, 0
    %p12 = scmp.lt.s32.totalorder %s11, 0
    %s13 = scalar_select %p12, %s11, 0
    %p14 = scmp.lt.s32.totalorder %s13, 0
    %s15 = scalar_select %p14, %s13, 0
    %s16 = smul.addr %s15, 8
    %s17 = scalar_lea.vmem %s0, %s16
    %s18 = sadd.s32 0, 0
    %p19 = scmp.lt.s32.totalorder %s18, 0
    %s20 = scalar_select %p19, %s18, 0
  $region5: #{_safety_loss.1} parent=0 // pred_fallthru
    _
  // Predicated region
  $region6: #{_safety_loss.1} parent=0 // pred_check
    _
  $region7: #{_safety_loss.1} parent=0 // pred_check_branch
    %22 = sbr.rel (0) target = $region9
  $region8: #{_safety_loss.1} parent=0 // pred_region
    _
  $region9: #{_safety_loss.1} parent=0 // pred_fallthru
    _
  // Predicated region
  $region10: #{_safety_loss.1} parent=0 // pred_check
    _
  $region11: #{_safety_loss.1} parent=0 // pred_check_branch
    %24 = sbr.rel (0) target = $region13
  $region12: #{_safety_loss.1} parent=0 // pred_region
    _
  $region13: #{_safety_loss.1} parent=0 // pred_fallthru
    _
  // Predicated region
  $region14: #{_safety_loss.1} parent=0 // pred_check
    _
  $region15: #{_safety_loss.1} parent=0 // pred_check_branch
    %26 = sbr.rel (0) target = $region17
  $region16: #{_safety_loss.1} parent=0 // pred_region
    _
  $region17: #{_safety_loss.1} parent=0 // pred_fallthru
    _
  %s27 = sadd.s32 0, 0
  %p28 = scmp.lt.s32.totalorder %s27, 0
  %s29 = scalar_select %p28, %s27, 0
  %p30 = scmp.lt.s32.totalorder %s29, 0
  %s31 = scalar_select %p30, %s29, 0
  %s32 = smul.addr %s31, 8
  %s33 = scalar_lea.vmem %s0, %s32
  %s34 = sadd.s32 0, 0
  %p35 = scmp.lt.s32.totalorder %s34, 0
  %s36 = scalar_select %p35, %s34, 0
  %p37 = scmp.lt.s32.totalorder %s36, 0
  %s38 = scalar_select %p37, %s36, 0
  %s39 = smul.addr %s38, 8
  %s40 = scalar_lea.vmem %s0, %s39
  %s41 = sadd.s32 0, 0
  %p42 = scmp.lt.s32.totalorder %s41, 0
  %s43 = scalar_select %p42, %s41, 0
  %s44 = sadd.s32 0, 0
  %p45 = scmp.eq.s32.totalorder 0, 0
  // Predicated region
  $region18: #{_safety_loss.1} parent=0 // pred_check
    %p46 = pneg %p45
  $region19: #{_safety_loss.1} parent=0 // pred_check_branch
    %48 = sbr.rel (%p46) target = $region21
  $region20: #{_safety_loss.1} parent=0 // pred_region
    %49 = vst [vmem:[#allocation2] sm:$0xff] 0.0
  $region21: #{_safety_loss.1} parent=0 // pred_fallthru
    _
  %v50 = vld [vmem:[%s40] sm:$0xff]
  %v51 = vld [vmem:[%s1] sm:$0x1]
  %v53 = vlaneseq
  %v54 = vshrl.u32 %v53, 7
  %v55 = vsub.s32 0, %v54
  %v56 = vrot.slane %v51, %v55
  %v58 = vsub.f32 %v56, %v50
  %v59 = vld [vmem:[%s2] sm:$0x1]
  %v61 = vlaneseq
  %v62 = vshrl.u32 %v61, 7
  %v63 = vsub.s32 0, %v62
  %v64 = vrot.slane %v59, %v63
  %v66 = vsub.f32 %v50, %v64
  %v67 = vmax.f32 %v58, %v66
  %v68 = vmax.f32 %v67, 0.0
  %v69 = vld [vmem:[%s3] sm:$0x1]
  %vm70 = vcmp.gt.f32.partialorder %v69, 0.0
  %v71 = vsel %vm70, 1, 0
  %v72 = vlaneseq
  %v73 = vshrl.u32 %v72, 7
  %v74 = vsub.s32 0, %v73
  %v75 = vrot.slane %v71, %v74
  %vm76 = vcmp.eq.s32.totalorder %v75, 1
  %v77 = vsel %vm76, %v68, 0.0
  %p78 = scmp.lt.s32.totalorder %s44, 0
  // Predicated region
  $region22: #{_safety_loss.1} parent=0 // pred_check
    %p79 = pneg %p78
  $region23: #{_safety_loss.1} parent=0 // pred_check_branch
    %81 = sbr.rel (%p79) target = $region25
  $region24: #{_safety_loss.1} parent=0 // pred_region
    %v82 = vld [vmem:[#allocation2] sm:$0xff]
    %v83 = vadd.f32 %v77, 0.0
    %v84 = vadd.f32 %v82, %v83
    %85 = vst [vmem:[#allocation2] sm:$0xff] %v84
  $region25: #{_safety_loss.1} parent=0 // pred_fallthru
    _
  %p86 = scmp.eq.s32.totalorder %s44, 0
  // Predicated region
  $region26: #{_safety_loss.1} parent=0 // pred_check
    %p87 = pneg %p86
  $region27: #{_safety_loss.1} parent=0 // pred_check_branch
    %89 = sbr.rel (%p87) target = $region29
  $region28: #{_safety_loss.1} parent=0 // pred_region
    %s90 = smul.u32 %s44, 8
    %v91 = vlaneseq
    %v92 = vshrl.u32 %v91, 7
    %v93 = vstv %s90
    %v94 = vadd.s32 %v93, %v92
    %v95 = vlaneseq
    %v96 = vand.u32 %v95, 127
    %vm97 = vcmp.lt.s32.totalorder %v94, 0
    %vm98 = vcmp.eq.s32.totalorder %v94, 0
    %vm99 = vcmp.lt.s32.totalorder %v96, 64
    %v100 = vsel %vm98, 1, 0
    %vm101 = vcmp.eq.s32.totalorder %v100, 1
    %v102 = vsel %vm99, 1, 0
    %vm103 = vcmp.eq.s32.totalorder %v102, 1
    %vm104 = vmand %vm101, %vm103
    %v105 = vsel %vm97, 1, 0
    %vm106 = vcmp.eq.s32.totalorder %v105, 1
    %vm107 = vmor %vm106, %vm104
    %v108 = vsel %vm107, %v77, 0.0
    %v109 = vld [vmem:[#allocation2] sm:$0xff]
    %v110 = vadd.f32 %v108, 0.0
    %v111 = vadd.f32 %v109, %v110
    %112 = vst [vmem:[#allocation2] sm:$0xff] %v111
  $region29: #{_safety_loss.1} parent=0 // pred_fallthru
    _
  // Predicated region
  $region30: #{_safety_loss.1} parent=0 // pred_check
    %p113 = pneg %p45
  $region31: #{_safety_loss.1} parent=0 // pred_check_branch
    %115 = sbr.rel (%p113) target = $region33
  $region32: #{_safety_loss.1} parent=0 // pred_region
    %v116 = vld [vmem:[#allocation2] sm:$0xff]
    %117 = vadd.xlane.f32.xlu0 %v116
    %v118 = vpop.xlane.xlu0 %117
    %v119 = vrot.slane %v118, 4
    %v120 = vadd.f32 %v118, %v119
    %v121 = vrot.slane %v120, 2
    %v122 = vadd.f32 %v120, %v121
    %v123 = vrot.slane %v122, 1
    %v124 = vadd.f32 %v122, %v123
    %s125 = vtos %v124
    %v126 = vstv %s125
    %127 = vst [vmem:[%s4] sm:$0x1] %v126
  $region33: #{_safety_loss.1} parent=0 // pred_fallthru
    _
  // Predicated region
  $region34: #{_safety_loss.1} parent=0 // pred_check
    _
  $region35: #{_safety_loss.1} parent=0 // pred_check_branch
    %129 = sbr.rel (0) target = $region37
  $region36: #{_safety_loss.1} parent=0 // pred_region
    _
  $region37: #{_safety_loss.1} parent=0 // pred_fallthru
    _
  // Predicated region
  $region38: #{_safety_loss.1} parent=0 // pred_check
    _
  $region39: #{_safety_loss.1} parent=0 // pred_check_branch
    %131 = sbr.rel (0) target = $region41
  $region40: #{_safety_loss.1} parent=0 // pred_region
    _
  $region41: #{_safety_loss.1} parent=0 // pred_fallthru
    _

</llo_original>
